<compile_context>
chip_gen: v6e
topology: v6e:2x2x1
jax: 0.10.0
libtpu: 0.0.40
codegen_flags: <defaults>
</compile_context>

<pallas_src>
import jax
import jax.numpy as jnp
from jax import lax
from jax.experimental import pallas as pl
from jax.experimental.pallas import tpu as pltpu


# ----------------------------------------------------------------------------
# Wrapper-built combined matrix: shift + zero-pad + conv weights + coef
# ----------------------------------------------------------------------------
def _build_combined_matrix(shift, coef, conv_w, H, out_dtype):
    """M[b, oc*H+i, ic*H+j] = coef[b,oc] * sum_kh w[oc,ic,kh]
                               * [0 <= i+kh-pad < H]
                               * [j == (i+kh-pad+shift[b,ic]) mod H]
    so that relu(M_b @ x_flat) == coef * relu(conv(vertical_shift(x)))."""
    B, C = shift.shape
    K = conv_w.shape[-1]
    pad = K // 2
    i = jnp.arange(H)[:, None]                                   # output row
    kh = jnp.arange(K)[None, :]                                  # kernel tap
    src = i + kh - pad                                           # (H, K)
    valid = ((src >= 0) & (src < H)).astype(jnp.float32)         # zero-pad mask
    src_mod = (src[None, None] + shift[:, :, None, None]) % H    # (B, C, H, K)
    onehot = jax.nn.one_hot(src_mod, H, dtype=jnp.float32)       # (B, Cin, H, K, H)
    onehot = onehot * valid[None, None, :, :, None]
    # Fold coef (>= 0) into the weights up front; emit the einsum directly in the
    # final (b, oc, i, ic, j) memory order so the reshape is a free view.
    w_scaled = conv_w[None] * coef[:, :, None, None]             # (B, O, I, K)
    g = jnp.einsum("bock,bcikj->boicj", w_scaled, onehot)        # (B, O, H, I, H)
    return g.reshape(B, C * H, C * H).astype(out_dtype)


# ----------------------------------------------------------------------------
# Pallas kernel: per-batch matmul (shift+conv+coef folded into M) + relu + add
# ----------------------------------------------------------------------------
def _tensorcores_per_chip() -> int:
    try:
        kind = jax.devices()[0].device_kind.lower()
    except Exception:
        return 1
    return 2 if "v7" in kind else 1   # v5e/v6e: 1 TC per chip; v7x: 2 TCs


def pallas_shift_conv_add(x, m, *, batch_blocks=None):
    B, C, H, W = x.shape
    CH = C * H
    x_flat = x.reshape(B, CH, W)

    # Grid collapse: 1 step on single-TC chips, 2 parallel steps on v7x.
    if batch_blocks is None:
        n_cores = _tensorcores_per_chip()
        batch_blocks = n_cores if (n_cores > 1 and B % n_cores == 0) else 1
    batch_blocks = max(1, min(int(batch_blocks), B))
    assert B % batch_blocks == 0, "batch must divide evenly into grid steps"
    bb = B // batch_blocks                     # batch elements per grid step

    def kernel(m_ref, x_ref, o_ref):
        # m_ref: (bb, CH, CH) bf16 ; x_ref/o_ref: (bb, CH, W) in x.dtype
        for i in range(bb):                    # static unroll over the block
            xi = x_ref[i]                                          # (CH, W)
            acc = jnp.dot(m_ref[i], xi.astype(m_ref.dtype),
                          preferred_element_type=jnp.float32)      # MXU, f32 acc
            # relu + residual stay f32 (VPU); downcast only at the store.
            o_ref[i] = (xi.astype(jnp.float32)
                        + jnp.maximum(acc, 0.0)).astype(o_ref.dtype)

    # VMEM budget: double-buffered (M block + x block + out block); keep the
    # scoped limit comfortably under v7x's 64 MiB physical VMEM.
    m_bytes = bb * CH * CH * m.dtype.itemsize
    io_bytes = bb * CH * W * x.dtype.itemsize
    vmem_needed = 2 * (m_bytes + 2 * io_bytes)
    vmem_limit = int(min(56 * 2**20, max(vmem_needed + (1 << 20), 32 * 2**20)))

    cost = pl.CostEstimate(
        flops=2 * B * CH * CH * W,
        transcendentals=0,
        bytes_accessed=B * (CH * CH * m.dtype.itemsize
                            + 2 * CH * W * x.dtype.itemsize),
    )

    out = pl.pallas_call(
        kernel,
        out_shape=jax.ShapeDtypeStruct((B, CH, W), x.dtype),
        grid=(batch_blocks,),
        in_specs=[
            pl.BlockSpec((bb, CH, CH), lambda g: (g, 0, 0)),
            pl.BlockSpec((bb, CH, W), lambda g: (g, 0, 0)),
        ],
        out_specs=pl.BlockSpec((bb, CH, W), lambda g: (g, 0, 0)),
        compiler_params=pltpu.CompilerParams(
            dimension_semantics=("parallel",),
            vmem_limit_bytes=vmem_limit,
        ),
        cost_estimate=cost,
    )(m, x_flat)
    return out.reshape(B, C, H, W)


# ----------------------------------------------------------------------------
# Full forward (functional equivalent of VerticalShiftConv2d.forward)
# ----------------------------------------------------------------------------
def vertical_shift_conv2d(x, conv_w, fc_w, fc_b, *, dot_dtype=jnp.bfloat16):
    """x: (B, C, H, W); conv_w: (C, C, K, 1); fc_w: (C, C); fc_b: (C,)."""
    B, C, H, W = x.shape
    # Pooling + fc + softmax glue deliberately left in XLA (dispatch-overhead
    # scale; dropping the separate Pallas pool was the biggest wall-clock win).
    pooled = jnp.mean(x.astype(jnp.float32), axis=(2, 3))        # AdaptiveAvgPool2d
    scores = pooled @ fc_w.T + fc_b                              # nn.Linear
    # NOTE: divides by zero if all fc scores are exactly 0 for a batch element;
    # behavior inherited from the PyTorch reference (no guard there either).
    hn = scores / jnp.max(jnp.abs(scores), axis=1, keepdims=True)
    shift = (jnp.floor(H * hn).astype(jnp.int32) + H) % H                    # (B, C)
    coef = (1.0 - jax.nn.softmax(jnp.abs(hn), axis=1)).astype(jnp.float32)   # (B, C)
    m = _build_combined_matrix(shift, coef, conv_w[..., 0].astype(jnp.float32),
                               H, dot_dtype)
    # Hot path: one matmul + relu + residual per batch element, in Pallas.
    return pallas_shift_conv_add(x, m)


# ----------------------------------------------------------------------------
# Pure-JAX reference (mirrors the PyTorch forward exactly, f32 throughout)
# ----------------------------------------------------------------------------
def reference_forward(x, conv_w, fc_w, fc_b):
    B, C, H, W = x.shape
    K = conv_w.shape[2]
    pooled = jnp.mean(x, axis=(2, 3))
    scores = pooled @ fc_w.T + fc_b
    hn = scores / jnp.max(jnp.abs(scores), axis=1, keepdims=True)
    idx_bottom = jnp.floor(H * hn).astype(jnp.int32) + H                    # (B, C)
    idx = (jnp.arange(H)[None, None, :] + idx_bottom[:, :, None]) % H       # (B, C, H)
    idx = jnp.broadcast_to(idx[..., None], (B, C, H, W))
    shifted = jnp.take_along_axis(x, idx, axis=2)
    conv = lax.conv_general_dilated(
        shifted, conv_w, window_strides=(1, 1),
        padding=((K // 2, K // 2), (0, 0)),
        dimension_numbers=("NCHW", "OIHW", "NCHW"))
    soft = jax.nn.softmax(jnp.abs(hn), axis=1)
    return x + (1.0 - soft)[:, :, None, None] * jax.nn.relu(conv)


if __name__ == "__main__":
    B, C, H, W, K = 2, 4, 16, 128, 3   # in_c=4, kernel_len=3, feature_size=(16, 128)

    key = jax.random.PRNGKey(0)
    kx, kc, kw, kb = jax.random.split(key, 4)
    x = jax.random.normal(kx, (B, C, H, W), dtype=jnp.float32)
    conv_w = 0.1 * jax.random.normal(kc, (C, C, K, 1), dtype=jnp.float32)   # Conv2d (O,I,kH,kW), bias=False
    fc_w = 0.1 * jax.random.normal(kw, (C, C), dtype=jnp.float32)           # Linear weight (out, in)
    fc_b = 0.1 * jax.random.normal(kb, (C,), dtype=jnp.float32)             # Linear bias

    out = jax.block_until_ready(vertical_shift_conv2d(x, conv_w, fc_w, fc_b))
    ref = reference_forward(x, conv_w, fc_w, fc_b)

    assert out.shape == x.shape and out.dtype == x.dtype
    # bf16 dot (f32 accumulate) vs f32 reference -> looser tolerance.
    if not jnp.allclose(out, ref, atol=2e-2, rtol=2e-2):
        raise AssertionError(f"mismatch, max abs err = {jnp.max(jnp.abs(out - ref))}")
    print("KERNEL_OK")
</pallas_src>

<mosaic_0001>
module attributes {stable_mosaic.version = 11 : i64} {
  func.func @kernel(%arg0: i32, %arg1: memref<2x64x64xbf16, #tpu.memory_space<vmem>>, %arg2: memref<2x64x128xf32, #tpu.memory_space<vmem>>, %arg3: memref<2x64x128xf32, #tpu.memory_space<vmem>>) attributes {dimension_semantics = [#tpu.dimension_semantics<parallel>], iteration_bounds = array<i64: 1>, scalar_prefetch = 0 : i64, scratch_operands = 0 : i64, tpu.core_type = #tpu.core_type<tc>, window_params = [{transform_indices = @transform_0, window_bounds = array<i64: 2, 64, 64>}, {transform_indices = @transform_1, window_bounds = array<i64: 2, 64, 128>}, {transform_indices = @transform_2, window_bounds = array<i64: 2, 64, 128>}]} {
    %c0 = arith.constant 0 : index
    %c0_0 = arith.constant 0 : index
    %c0_1 = arith.constant 0 : index
    %0 = vector.load %arg2[%c0, %c0_0, %c0_1] : memref<2x64x128xf32, #tpu.memory_space<vmem>>, vector<1x64x128xf32>
    %1 = vector.shape_cast %0 : vector<1x64x128xf32> to vector<64x128xf32>
    %c0_2 = arith.constant 0 : index
    %c0_3 = arith.constant 0 : index
    %c0_4 = arith.constant 0 : index
    %2 = vector.load %arg1[%c0_2, %c0_3, %c0_4] : memref<2x64x64xbf16, #tpu.memory_space<vmem>>, vector<1x64x64xbf16>
    %3 = vector.shape_cast %2 : vector<1x64x64xbf16> to vector<64x64xbf16>
    %4 = arith.truncf %1 : vector<64x128xf32> to vector<64x128xbf16>
    %cst = arith.constant dense<0.000000e+00> : vector<64x128xf32>
    %5 = tpu.matmul %3, %4, %cst {dimension_numbers = #tpu.dot_dimension_numbers<[1], [0], [0], [1], [0, 0, 1, 1], [], []>} : vector<64x64xbf16>, vector<64x128xbf16>, vector<64x128xf32> -> vector<64x128xf32>
    %cst_5 = arith.constant 0.000000e+00 : f32
    %6 = vector.broadcast %cst_5 : f32 to vector<64x128xf32>
    %7 = arith.maximumf %5, %6 : vector<64x128xf32>
    %8 = arith.addf %1, %7 : vector<64x128xf32>
    %c0_6 = arith.constant 0 : index
    %c0_7 = arith.constant 0 : index
    %c0_8 = arith.constant 0 : index
    %9 = vector.load %arg3[%c0_6, %c0_7, %c0_8] : memref<2x64x128xf32, #tpu.memory_space<vmem>>, vector<1x64x128xf32>
    %10 = vector.shape_cast %9 : vector<1x64x128xf32> to vector<64x128xf32>
    %11 = vector.shape_cast %8 : vector<64x128xf32> to vector<1x64x128xf32>
    tpu.vector_store %arg3[%c0_6, %c0_7, %c0_8], %11 {strides = array<i32>} : memref<2x64x128xf32, #tpu.memory_space<vmem>>, vector<1x64x128xf32>,
    %c1 = arith.constant 1 : index
    %c0_9 = arith.constant 0 : index
    %c0_10 = arith.constant 0 : index
    %12 = vector.load %arg2[%c1, %c0_9, %c0_10] : memref<2x64x128xf32, #tpu.memory_space<vmem>>, vector<1x64x128xf32>
    %13 = vector.shape_cast %12 : vector<1x64x128xf32> to vector<64x128xf32>
    %c1_11 = arith.constant 1 : index
    %c0_12 = arith.constant 0 : index
    %c0_13 = arith.constant 0 : index
    %14 = vector.load %arg1[%c1_11, %c0_12, %c0_13] : memref<2x64x64xbf16, #tpu.memory_space<vmem>>, vector<1x64x64xbf16>
    %15 = vector.shape_cast %14 : vector<1x64x64xbf16> to vector<64x64xbf16>
    %16 = arith.truncf %13 : vector<64x128xf32> to vector<64x128xbf16>
    %cst_14 = arith.constant dense<0.000000e+00> : vector<64x128xf32>
    %17 = tpu.matmul %15, %16, %cst_14 {dimension_numbers = #tpu.dot_dimension_numbers<[1], [0], [0], [1], [0, 0, 1, 1], [], []>} : vector<64x64xbf16>, vector<64x128xbf16>, vector<64x128xf32> -> vector<64x128xf32>
    %cst_15 = arith.constant 0.000000e+00 : f32
    %18 = vector.broadcast %cst_15 : f32 to vector<64x128xf32>
    %19 = arith.maximumf %17, %18 : vector<64x128xf32>
    %20 = arith.addf %13, %19 : vector<64x128xf32>
    %c1_16 = arith.constant 1 : index
    %c0_17 = arith.constant 0 : index
    %c0_18 = arith.constant 0 : index
    %21 = vector.load %arg3[%c1_16, %c0_17, %c0_18] : memref<2x64x128xf32, #tpu.memory_space<vmem>>, vector<1x64x128xf32>
    %22 = vector.shape_cast %21 : vector<1x64x128xf32> to vector<64x128xf32>
    %23 = vector.shape_cast %20 : vector<64x128xf32> to vector<1x64x128xf32>
    tpu.vector_store %arg3[%c1_16, %c0_17, %c0_18], %23 {strides = array<i32>} : memref<2x64x128xf32, #tpu.memory_space<vmem>>, vector<1x64x128xf32>,
    return
  }
  func.func @transform_0(%arg0: i32) -> (i32, i32, i32) {
    %c0_i32 = arith.constant 0 : i32
    %c0_i32_0 = arith.constant 0 : i32
    %c0_i32_1 = arith.constant 0 : i32
    return %arg0, %c0_i32, %c0_i32_0 : i32, i32, i32
  }
  func.func @transform_1(%arg0: i32) -> (i32, i32, i32) {
    %c0_i32 = arith.constant 0 : i32
    %c0_i32_0 = arith.constant 0 : i32
    %c0_i32_1 = arith.constant 0 : i32
    return %arg0, %c0_i32, %c0_i32_0 : i32, i32, i32
  }
  func.func @transform_2(%arg0: i32) -> (i32, i32, i32) {
    %c0_i32 = arith.constant 0 : i32
    %c0_i32_0 = arith.constant 0 : i32
    %c0_i32_1 = arith.constant 0 : i32
    return %arg0, %c0_i32, %c0_i32_0 : i32, i32, i32
  }
}

</mosaic_0001>

<llo_original>
// kernel: tpu_custom_call.1
$region0: #{tpu_custom_call.1}
  #allocation0 [shape = 'u32[]', space=smem, size = 0x4, offset = 0x4, fixed_abs, tag = 'smem constant byte address 0x4 - core index']
  #allocation1 [shape = 'u32[144,128]{1,0:T(1,128)}', space=vmem, size = 0x12000, scoped, tag = 'internal scratch']
  %s0 = inlined_call_operand.hbm [shape: bf16[2,64,64], index: 0, kind: input, shape index: {}]
  %s1 = inlined_call_operand.hbm [shape: f32[2,64,128], index: 1, kind: input, shape index: {}]
  %s2 = inlined_call_operand.hbm [shape: f32[2,64,128], index: 2, kind: output, shape index: {}]
  %s3 = sld [smem:[#allocation0]]
  $region26: #{tpu_custom_call.1} parent=0
    _
  %s5 = ssub.s32 1, %s3
  %s6 = scalar_select 0, %s5, %s3
  $region1: #{tpu_custom_call.1} parent=0
    #allocation2 [shape = 'u8[32768]{0}', space=vmem, size = 0x8000, scoped, tag = 'input window, operand 0, single buffered']
    #allocation3 [shape = 's32[1]{0}', space=sflag, size = 0x4, scoped, tag = 'scoped memory for tpu_custom_call.1']
    #allocation4 [shape = 's32[1]{0}', space=sflag, size = 0x4, scoped, tag = 'scoped memory for tpu_custom_call.1']
    #allocation5 [shape = 'u8[65536]{0}', space=vmem, size = 0x10000, scoped, tag = 'input window, operand 1, single buffered']
    #allocation6 [shape = 's32[1]{0}', space=sflag, size = 0x4, scoped, tag = 'scoped memory for tpu_custom_call.1']
    #allocation7 [shape = 'u8[65536]{0}', space=vmem, size = 0x10000, scoped, tag = 'output window, operand 0, single buffered']
    %7 = vsyncpa [#allocation3], 0
    %8 = vsyncpa [#allocation6], 0
    %9 = vsyncpa [#allocation4], 0
    // Predicated region
    $region2: #{tpu_custom_call.1} parent=1 // pred_check
      _
    $region3: #{tpu_custom_call.1} parent=1 // pred_check_branch
      %11 = sbr.rel (0) target = $region5
    $region4: #{tpu_custom_call.1} parent=1 // pred_region
      %s13 = ssub.s32 1024, 1024
      %14 = vsyncadd [#allocation3], %s13
      %s15 = sshll.u32 [#allocation2], 4
      %s16 = int_to_ptr.vmem [resolvable:$true] %s15
      %21 = dma.hbm_to_vmem [thread:$0]  %s0, 1024, %s16, [#allocation3], 64, 64, 4
    $region5: #{tpu_custom_call.1} parent=1 // pred_fallthru
      _
    // Predicated region
    $region6: #{tpu_custom_call.1} parent=1 // pred_check
      _
    $region7: #{tpu_custom_call.1} parent=1 // pred_check_branch
      %23 = sbr.rel (0) target = $region9
    $region8: #{tpu_custom_call.1} parent=1 // pred_region
      %s25 = ssub.s32 2048, 2048
      %26 = vsyncadd [#allocation6], %s25
      %s27 = sshll.u32 [#allocation5], 4
      %s28 = int_to_ptr.vmem [resolvable:$true] %s27
      %33 = dma.hbm_to_vmem [thread:$0]  %s1, 2048, %s28, [#allocation6], 128, 128, 8
    $region9: #{tpu_custom_call.1} parent=1 // pred_fallthru
      _
    // Predicated region
    $region10: #{tpu_custom_call.1} parent=1 // pred_check
      _
    $region11: #{tpu_custom_call.1} parent=1 // pred_check_branch
      %35 = sbr.rel (0) target = $region13
    $region12: #{tpu_custom_call.1} parent=1 // pred_region
      %36 = dma.done [#allocation3], 1024
    $region13: #{tpu_custom_call.1} parent=1 // pred_fallthru
      _
    // Predicated region
    $region14: #{tpu_custom_call.1} parent=1 // pred_check
      _
    $region15: #{tpu_custom_call.1} parent=1 // pred_check_branch
      %38 = sbr.rel (0) target = $region17
    $region16: #{tpu_custom_call.1} parent=1 // pred_region
      %39 = dma.done [#allocation6], 2048
    $region17: #{tpu_custom_call.1} parent=1 // pred_fallthru
      _
    %v41 = vld [vmem:[#allocation5] sm:$0xff]
    %v42 = vld [vmem:[#allocation5 + $0x8] sm:$0xff]
    %v43 = vld [vmem:[#allocation5 + $0x10] sm:$0xff]
    %v44 = vld [vmem:[#allocation5 + $0x18] sm:$0xff]
    %v45 = vld [vmem:[#allocation5 + $0x20] sm:$0xff]
    %v46 = vld [vmem:[#allocation5 + $0x28] sm:$0xff]
    %v47 = vld [vmem:[#allocation5 + $0x30] sm:$0xff]
    %v48 = vld [vmem:[#allocation5 + $0x38] sm:$0xff]
    %v49 = vld [vmem:[#allocation2] sm:$0xf]
    %v50 = vld [vmem:[#allocation2 + $0x4] sm:$0xf]
    %v51 = vld [vmem:[#allocation2 + $0x8] sm:$0xf]
    %v52 = vld [vmem:[#allocation2 + $0xc] sm:$0xf]
    %v53 = vld [vmem:[#allocation2 + $0x10] sm:$0xf]
    %v54 = vld [vmem:[#allocation2 + $0x14] sm:$0xf]
    %v55 = vld [vmem:[#allocation2 + $0x18] sm:$0xf]
    %v56 = vld [vmem:[#allocation2 + $0x1c] sm:$0xf]
    %v57 = vpack.c.bf16 %v42, %v41
    %v58 = vpack.c.bf16 %v44, %v43
    %v59 = vpack.c.bf16 %v46, %v45
    %v60 = vpack.c.bf16 %v48, %v47
    %v69 = vunpack.c.l.b16 %v49
    %v70 = vunpack.c.l.b16 %v50
    %v71 = vunpack.c.l.b16 %v51
    %v72 = vunpack.c.l.b16 %v52
    %v73 = vunpack.c.l.b16 %v53
    %v74 = vunpack.c.l.b16 %v54
    %v75 = vunpack.c.l.b16 %v55
    %v76 = vunpack.c.l.b16 %v56
    %v77 = vpack.c.b16 %v70, %v69
    %v78 = vpack.c.b16 %v72, %v71
    %v79 = vpack.c.b16 %v74, %v73
    %v80 = vpack.c.b16 %v76, %v75
    %vm81 = vcmask 523264
    %v83 = vsel %vm81, %v77, 0
    %v86 = vsel %vm81, %v78, 0
    %v89 = vsel %vm81, %v79, 0
    %v92 = vsel %vm81, %v80, 0
    %94 = vmatprep.subr.bf16.mxu0 0
    %95 = vmatpush1.bf16.msra.mxu0 0
    %96 = vmatprep.subr.bf16.mxu0 0
    %97 = vmatpush1.bf16.msra.mxu0 0
    %98 = vmatprep.subr.bf16.mxu0 0
    %99 = vmatpush1.bf16.msra.mxu0 0
    %100 = vmatprep.subr.bf16.mxu0 0
    %101 = vmatpush1.bf16.msra.mxu0 0
    %102 = vmatprep.subr.bf16.mxu0 0
    %103 = vmatpush1.bf16.msra.mxu0 %v60
    %104 = vmatprep.subr.bf16.mxu0 0
    %105 = vmatpush1.bf16.msra.mxu0 %v59
    %106 = vmatprep.subr.bf16.mxu0 0
    %107 = vmatpush1.bf16.msra.mxu0 %v58
    %108 = vmatprep.subr.bf16.mxu0 0
    %109 = vmatpush1.bf16.msra.mxu0 %v57
    %110 = vmatprep.subr.bf16.mxu0 0
    %111 = vmatpush2.bf16.msra.mxu0 0
    %112 = vmatprep.subr.bf16.mxu0 0
    %113 = vmatpush2.bf16.msra.mxu0 0
    %114 = vmatprep.subr.bf16.mxu0 0
    %115 = vmatpush2.bf16.msra.mxu0 0
    %116 = vmatprep.subr.bf16.mxu0 0
    %117 = vmatpush2.bf16.msra.mxu0 0
    %118 = vmatprep.subr.bf16.mxu0 0
    %119 = vmatpush2.bf16.msra.mxu0 0
    %120 = vmatprep.subr.bf16.mxu0 0
    %121 = vmatpush2.bf16.msra.mxu0 0
    %122 = vmatprep.subr.bf16.mxu0 0
    %123 = vmatpush2.bf16.msra.mxu0 0
    %124 = vmatprep.subr.bf16.mxu0 0
    %125 = vmatpush2.bf16.msra.mxu0 0
    %126 = vmatprep.mubr.bf16.mxu0 0
    %127 = vmatmul.mubr.bf16.gmra.mxu0 %v83
    %v128 = vpop.f32.mrf.mxu0
    %v129 = vadd.f32 0.0, %v128
    %v130 = vpop.f32.mrf.mxu0
    %v131 = vpop.f32.mrf.mxu0
    %v132 = vadd.f32 0.0, %v131
    %v133 = vpop.f32.mrf.mxu0
    %134 = vmatprep.mubr.bf16.mxu0 0
    %135 = vmatmul.mubr.bf16.gmra.mxu0 %v86
    %v136 = vpop.f32.mrf.mxu0
    %v137 = vadd.f32 0.0, %v136
    %v138 = vpop.f32.mrf.mxu0
    %v139 = vpop.f32.mrf.mxu0
    %v140 = vadd.f32 0.0, %v139
    %v141 = vpop.f32.mrf.mxu0
    %142 = vmatprep.mubr.bf16.mxu0 0
    %143 = vmatmul.mubr.bf16.gmra.mxu0 %v89
    %v144 = vpop.f32.mrf.mxu0
    %v145 = vadd.f32 0.0, %v144
    %v146 = vpop.f32.mrf.mxu0
    %v147 = vpop.f32.mrf.mxu0
    %v148 = vadd.f32 0.0, %v147
    %v149 = vpop.f32.mrf.mxu0
    %150 = vmatprep.mubr.bf16.mxu0 0
    %151 = vmatmul.mubr.bf16.gmra.mxu0 %v92
    %v152 = vpop.f32.mrf.mxu0
    %v153 = vadd.f32 0.0, %v152
    %v154 = vpop.f32.mrf.mxu0
    %v155 = vpop.f32.mrf.mxu0
    %v156 = vadd.f32 0.0, %v155
    %v157 = vpop.f32.mrf.mxu0
    %158 = vdwg.mxu0
    %v159 = vmax.f32 %v129, 0.0
    %v160 = vmax.f32 %v132, 0.0
    %v161 = vmax.f32 %v137, 0.0
    %v162 = vmax.f32 %v140, 0.0
    %v163 = vmax.f32 %v145, 0.0
    %v164 = vmax.f32 %v148, 0.0
    %v165 = vmax.f32 %v153, 0.0
    %v166 = vmax.f32 %v156, 0.0
    %v167 = vadd.f32 %v41, %v159
    %v168 = vadd.f32 %v42, %v160
    %v169 = vadd.f32 %v43, %v161
    %v170 = vadd.f32 %v44, %v162
    %v171 = vadd.f32 %v45, %v163
    %v172 = vadd.f32 %v46, %v164
    %v173 = vadd.f32 %v47, %v165
    %v174 = vadd.f32 %v48, %v166
    %175 = vst [vmem:[#allocation7] sm:$0xff] %v167
    %176 = vst [vmem:[#allocation7 + $0x8] sm:$0xff] %v168
    %177 = vst [vmem:[#allocation7 + $0x10] sm:$0xff] %v169
    %178 = vst [vmem:[#allocation7 + $0x18] sm:$0xff] %v170
    %179 = vst [vmem:[#allocation7 + $0x20] sm:$0xff] %v171
    %180 = vst [vmem:[#allocation7 + $0x28] sm:$0xff] %v172
    %181 = vst [vmem:[#allocation7 + $0x30] sm:$0xff] %v173
    %182 = vst [vmem:[#allocation7 + $0x38] sm:$0xff] %v174
    %s183 = scalar_lea.vmem [#allocation5], 64
    %v184 = vld [vmem:[%s183] sm:$0xff]
    %v185 = vld [vmem:[%s183 + $0x8] sm:$0xff]
    %v186 = vld [vmem:[%s183 + $0x10] sm:$0xff]
    %v187 = vld [vmem:[%s183 + $0x18] sm:$0xff]
    %v188 = vld [vmem:[%s183 + $0x20] sm:$0xff]
    %v189 = vld [vmem:[%s183 + $0x28] sm:$0xff]
    %v190 = vld [vmem:[%s183 + $0x30] sm:$0xff]
    %v191 = vld [vmem:[%s183 + $0x38] sm:$0xff]
    %s192 = scalar_lea.vmem [#allocation2], 32
    %v193 = vld [vmem:[%s192] sm:$0xf]
    %v194 = vld [vmem:[%s192 + $0x4] sm:$0xf]
    %v195 = vld [vmem:[%s192 + $0x8] sm:$0xf]
    %v196 = vld [vmem:[%s192 + $0xc] sm:$0xf]
    %v197 = vld [vmem:[%s192 + $0x10] sm:$0xf]
    %v198 = vld [vmem:[%s192 + $0x14] sm:$0xf]
    %v199 = vld [vmem:[%s192 + $0x18] sm:$0xf]
    %v200 = vld [vmem:[%s192 + $0x1c] sm:$0xf]
    %v201 = vpack.c.bf16 %v185, %v184
    %v202 = vpack.c.bf16 %v187, %v186
    %v203 = vpack.c.bf16 %v189, %v188
    %v204 = vpack.c.bf16 %v191, %v190
    %v213 = vunpack.c.l.b16 %v193
    %v214 = vunpack.c.l.b16 %v194
    %v215 = vunpack.c.l.b16 %v195
    %v216 = vunpack.c.l.b16 %v196
    %v217 = vunpack.c.l.b16 %v197
    %v218 = vunpack.c.l.b16 %v198
    %v219 = vunpack.c.l.b16 %v199
    %v220 = vunpack.c.l.b16 %v200
    %v221 = vpack.c.b16 %v214, %v213
    %v222 = vpack.c.b16 %v216, %v215
    %v223 = vpack.c.b16 %v218, %v217
    %v224 = vpack.c.b16 %v220, %v219
    %v226 = vsel %vm81, %v221, 0
    %v229 = vsel %vm81, %v222, 0
    %v232 = vsel %vm81, %v223, 0
    %v235 = vsel %vm81, %v224, 0
    %237 = vmatprep.subr.bf16.mxu0 0
    %238 = vmatpush1.bf16.msra.mxu0 0
    %239 = vmatprep.subr.bf16.mxu0 0
    %240 = vmatpush1.bf16.msra.mxu0 0
    %241 = vmatprep.subr.bf16.mxu0 0
    %242 = vmatpush1.bf16.msra.mxu0 0
    %243 = vmatprep.subr.bf16.mxu0 0
    %244 = vmatpush1.bf16.msra.mxu0 0
    %245 = vmatprep.subr.bf16.mxu0 0
    %246 = vmatpush1.bf16.msra.mxu0 %v204
    %247 = vmatprep.subr.bf16.mxu0 0
    %248 = vmatpush1.bf16.msra.mxu0 %v203
    %249 = vmatprep.subr.bf16.mxu0 0
    %250 = vmatpush1.bf16.msra.mxu0 %v202
    %251 = vmatprep.subr.bf16.mxu0 0
    %252 = vmatpush1.bf16.msra.mxu0 %v201
    %253 = vmatprep.subr.bf16.mxu0 0
    %254 = vmatpush2.bf16.msra.mxu0 0
    %255 = vmatprep.subr.bf16.mxu0 0
    %256 = vmatpush2.bf16.msra.mxu0 0
    %257 = vmatprep.subr.bf16.mxu0 0
    %258 = vmatpush2.bf16.msra.mxu0 0
    %259 = vmatprep.subr.bf16.mxu0 0
    %260 = vmatpush2.bf16.msra.mxu0 0
    %261 = vmatprep.subr.bf16.mxu0 0
    %262 = vmatpush2.bf16.msra.mxu0 0
    %263 = vmatprep.subr.bf16.mxu0 0
    %264 = vmatpush2.bf16.msra.mxu0 0
    %265 = vmatprep.subr.bf16.mxu0 0
    %266 = vmatpush2.bf16.msra.mxu0 0
    %267 = vmatprep.subr.bf16.mxu0 0
    %268 = vmatpush2.bf16.msra.mxu0 0
    %269 = vmatprep.mubr.bf16.mxu0 0
    %270 = vmatmul.mubr.bf16.gmra.mxu0 %v226
    %v271 = vpop.f32.mrf.mxu0
    %v272 = vadd.f32 0.0, %v271
    %v273 = vpop.f32.mrf.mxu0
    %v274 = vpop.f32.mrf.mxu0
    %v275 = vadd.f32 0.0, %v274
    %v276 = vpop.f32.mrf.mxu0
    %277 = vmatprep.mubr.bf16.mxu0 0
    %278 = vmatmul.mubr.bf16.gmra.mxu0 %v229
    %v279 = vpop.f32.mrf.mxu0
    %v280 = vadd.f32 0.0, %v279
    %v281 = vpop.f32.mrf.mxu0
    %v282 = vpop.f32.mrf.mxu0
    %v283 = vadd.f32 0.0, %v282
    %v284 = vpop.f32.mrf.mxu0
    %285 = vmatprep.mubr.bf16.mxu0 0
    %286 = vmatmul.mubr.bf16.gmra.mxu0 %v232
    %v287 = vpop.f32.mrf.mxu0
    %v288 = vadd.f32 0.0, %v287
    %v289 = vpop.f32.mrf.mxu0
    %v290 = vpop.f32.mrf.mxu0
    %v291 = vadd.f32 0.0, %v290
    %v292 = vpop.f32.mrf.mxu0
    %293 = vmatprep.mubr.bf16.mxu0 0
    %294 = vmatmul.mubr.bf16.gmra.mxu0 %v235
    %v295 = vpop.f32.mrf.mxu0
    %v296 = vadd.f32 0.0, %v295
    %v297 = vpop.f32.mrf.mxu0
    %v298 = vpop.f32.mrf.mxu0
    %v299 = vadd.f32 0.0, %v298
    %v300 = vpop.f32.mrf.mxu0
    %301 = vdwg.mxu0
    %v302 = vmax.f32 %v272, 0.0
    %v303 = vmax.f32 %v275, 0.0
    %v304 = vmax.f32 %v280, 0.0
    %v305 = vmax.f32 %v283, 0.0
    %v306 = vmax.f32 %v288, 0.0
    %v307 = vmax.f32 %v291, 0.0
    %v308 = vmax.f32 %v296, 0.0
    %v309 = vmax.f32 %v299, 0.0
    %v310 = vadd.f32 %v184, %v302
    %v311 = vadd.f32 %v185, %v303
    %v312 = vadd.f32 %v186, %v304
    %v313 = vadd.f32 %v187, %v305
    %v314 = vadd.f32 %v188, %v306
    %v315 = vadd.f32 %v189, %v307
    %v316 = vadd.f32 %v190, %v308
    %v317 = vadd.f32 %v191, %v309
    %s318 = scalar_lea.vmem [#allocation7], 64
    %319 = vst [vmem:[%s318] sm:$0xff] %v310
    %320 = vst [vmem:[%s318 + $0x8] sm:$0xff] %v311
    %321 = vst [vmem:[%s318 + $0x10] sm:$0xff] %v312
    %322 = vst [vmem:[%s318 + $0x18] sm:$0xff] %v313
    %323 = vst [vmem:[%s318 + $0x20] sm:$0xff] %v314
    %324 = vst [vmem:[%s318 + $0x28] sm:$0xff] %v315
    %325 = vst [vmem:[%s318 + $0x30] sm:$0xff] %v316
    %326 = vst [vmem:[%s318 + $0x38] sm:$0xff] %v317
    // Predicated region
    $region18: #{tpu_custom_call.1} parent=1 // pred_check
      _
    $region19: #{tpu_custom_call.1} parent=1 // pred_check_branch
      %328 = sbr.rel (0) target = $region21
    $region20: #{tpu_custom_call.1} parent=1 // pred_region
      %s330 = ssub.s32 2048, 2048
      %331 = vsyncadd [#allocation4], %s330
      %s332 = sshll.u32 [#allocation7], 4
      %s333 = int_to_ptr.vmem [resolvable:$true] %s332
      %338 = dma.vmem_to_hbm [thread:$0]  %s333, 2048, %s2, [#allocation4], 128, 128, 8
    $region21: #{tpu_custom_call.1} parent=1 // pred_fallthru
      _
    // Predicated region
    $region22: #{tpu_custom_call.1} parent=1 // pred_check
      _
    $region23: #{tpu_custom_call.1} parent=1 // pred_check_branch
      %340 = sbr.rel (0) target = $region25
    $region24: #{tpu_custom_call.1} parent=1 // pred_region
      %341 = dma.done [#allocation4], 2048
    $region25: #{tpu_custom_call.1} parent=1 // pred_fallthru
      _
    %342 = vsyncpa [#allocation3], 1
    %343 = vsyncpa [#allocation6], 1
    %344 = vsyncpa [#allocation4], 1

</llo_original>
